<compile_context>
chip_gen: v7x
topology: tpu7x:2x2x1
jax: 0.10.0
libtpu: 0.0.40
codegen_flags: <defaults>
</compile_context>

<pallas_src>
import functools

import jax
import jax.numpy as jnp
from jax.experimental import pallas as pl
from jax.experimental.pallas import tpu as pltpu


def _round_up(a, b):
    return ((a + b - 1) // b) * b


def _mlp_kernel(x_ref, w1_ref, b1_ref, w2_ref, b2_ref, o_ref):
    # Fused linear1 -> ReLU -> linear2 on the current row tile of x.
    x = x_ref[...]                                              # (tm, in_w)   compute dtype
    h = jnp.dot(x, w1_ref[...], preferred_element_type=jnp.float32)
    h = jnp.maximum(h + b1_ref[...], 0.0)                       # (tm, mid_p)  f32 epilogue
    o = jnp.dot(h.astype(w2_ref.dtype), w2_ref[...],
                preferred_element_type=jnp.float32)
    o_ref[...] = (o + b2_ref[...]).astype(o_ref.dtype)          # (tm, out_p)  lane-dense store


def prepare_slim_params(params, width, *, compute_dtype=jnp.bfloat16, lane=128):
    """Slim, transpose, lane-pad and cast the weights ONCE (call this OUTSIDE the jitted forward).

    Returns (slim, out_w) where slim holds:
      w1: (in_w,  mid_p) compute_dtype     b1: (1, mid_p) f32
      w2: (mid_p, out_p) compute_dtype     b2: (1, out_p) f32
    with mid_p/out_p = widths padded up to multiples of `lane` (zeros), and out_w the true width.
    """
    w1, b1, w2, b2 = params["w1"], params["b1"], params["w2"], params["b2"]
    mid_size, in_size = w1.shape
    out_size, _ = w2.shape

    in_w = int(in_size * width)
    mid_w = int(mid_size * width)
    out_w = int(out_size * width)
    mid_p = _round_up(mid_w, lane)
    out_p = _round_up(out_w, lane)

    # Slim + transpose to row-major (K, N) layout for the MXU.
    w1s = jnp.transpose(w1[:mid_w, :in_w]).astype(compute_dtype)      # (in_w, mid_w)
    w2s = jnp.transpose(w2[:out_w, :mid_w]).astype(compute_dtype)     # (mid_w, out_w)
    b1s = b1[:mid_w].astype(jnp.float32).reshape(1, mid_w)
    b2s = b2[:out_w].astype(jnp.float32).reshape(1, out_w)

    # Zero-pad hidden / output widths to lane multiples.  Padded hidden columns stay exactly 0
    # after ReLU (W1 cols and b1 entries are 0), so they contribute nothing to the second dot.
    w1s = jnp.pad(w1s, ((0, 0), (0, mid_p - mid_w)))
    b1s = jnp.pad(b1s, ((0, 0), (0, mid_p - mid_w)))
    w2s = jnp.pad(w2s, ((0, mid_p - mid_w), (0, out_p - out_w)))
    b2s = jnp.pad(b2s, ((0, 0), (0, out_p - out_w)))

    slim = {"w1": w1s, "b1": b1s, "w2": w2s, "b2": b2s}
    return slim, out_w


def slimmable_mlp_forward(x, slim, *, out_w, tm=256):
    """x: (..., in_w) already slimmed.  slim: arrays from prepare_slim_params."""
    w1s, b1s, w2s, b2s = slim["w1"], slim["b1"], slim["w2"], slim["b2"]
    in_w, mid_p = w1s.shape
    out_p = w2s.shape[1]
    compute_dtype = w1s.dtype
    assert x.shape[-1] == in_w, "input must already be slimmed to int(in_size*width)"

    lead_shape = x.shape[:-1]
    x2d = x.reshape(-1, in_w)
    M = x2d.shape[0]

    # Row tile: >=128 and a multiple of 128 (also satisfies bf16 sublane packing), but no
    # larger than the padded row count.
    tm = _round_up(max(128, min(tm, _round_up(M, 128))), 128)
    grid_m = pl.cdiv(M, tm)
    Mp = grid_m * tm
    if Mp != M:
        x2d = jnp.pad(x2d, ((0, Mp - M), (0, 0)))
    x2d = x2d.astype(compute_dtype)

    # VMEM budget: double-buffered x/out tiles + resident weights/biases + f32 intermediate h.
    cbytes = jnp.dtype(compute_dtype).itemsize
    est = (2 * (tm * in_w * cbytes + tm * out_p * 4)
           + 2 * ((in_w * mid_p + mid_p * out_p) * cbytes + (mid_p + out_p) * 4)
           + tm * mid_p * 4)
    vmem_limit = int(min(64 * 1024 * 1024, max(32 * 1024 * 1024, 2 * est)))

    out2d = pl.pallas_call(
        _mlp_kernel,
        out_shape=jax.ShapeDtypeStruct((Mp, out_p), x.dtype),
        grid_spec=pltpu.PrefetchScalarGridSpec(
            num_scalar_prefetch=0,
            grid=(grid_m,),
            in_specs=[
                pl.BlockSpec((tm, in_w), lambda i: (i, 0)),       # x row tile
                pl.BlockSpec((in_w, mid_p), lambda i: (0, 0)),    # W1^T (resident, lane-padded)
                pl.BlockSpec((1, mid_p), lambda i: (0, 0)),       # b1
                pl.BlockSpec((mid_p, out_p), lambda i: (0, 0)),   # W2^T (resident, lane-padded)
                pl.BlockSpec((1, out_p), lambda i: (0, 0)),       # b2
            ],
            out_specs=pl.BlockSpec((tm, out_p), lambda i: (i, 0)),
        ),
        compiler_params=pltpu.CompilerParams(
            dimension_semantics=("parallel",),   # row tiles shard across TensorCores (v7x)
            vmem_limit_bytes=vmem_limit,
        ),
    )(x2d, w1s, b1s, w2s, b2s)

    # Slice off row and lane padding, restore leading dims.
    return out2d[:M, :out_w].reshape(*lead_shape, out_w)


def init_params(key, in_size, mid_size, out_size, dtype=jnp.float32):
    """Deterministic init mimicking nn.Linear default (uniform +-1/sqrt(fan_in))."""
    k1, k2, k3, k4 = jax.random.split(key, 4)
    lim1 = 1.0 / jnp.sqrt(in_size)
    lim2 = 1.0 / jnp.sqrt(mid_size)
    return {
        "w1": jax.random.uniform(k1, (mid_size, in_size), dtype, -lim1, lim1),
        "b1": jax.random.uniform(k2, (mid_size,), dtype, -lim1, lim1),
        "w2": jax.random.uniform(k3, (out_size, mid_size), dtype, -lim2, lim2),
        "b2": jax.random.uniform(k4, (out_size,), dtype, -lim2, lim2),
    }


def _reference(x, params, width):
    """Pure-JAX reference matching the PyTorch forward exactly."""
    w1, b1, w2, b2 = params["w1"], params["b1"], params["w2"], params["b2"]
    in_size, mid_size, out_size = w1.shape[1], w1.shape[0], w2.shape[0]
    in_w, mid_w, out_w = int(in_size * width), int(mid_size * width), int(out_size * width)
    h = x @ w1[:mid_w, :in_w].T + b1[:mid_w]
    h = jnp.maximum(h, 0.0)
    return h @ w2[:out_w, :mid_w].T + b2[:out_w]


if __name__ == "__main__":
    # Small shapes consistent with the module's forward.
    in_size, mid_size, out_size = 32, 64, 32
    batch, seq = 2, 8
    width = 0.5
    in_w = int(in_size * width)

    key = jax.random.PRNGKey(0)
    kx, kp = jax.random.split(key)
    params = init_params(kp, in_size, mid_size, out_size)
    # Input already slimmed to int(in_size*width) features, as F.linear requires.
    x = jax.random.normal(kx, (batch, seq, in_w), dtype=jnp.float32)
    ref = _reference(x, params, width)

    # f32 MXU path: exact parity with the reference math.
    slim32, out_w = prepare_slim_params(params, width, compute_dtype=jnp.float32)
    fwd32 = jax.jit(functools.partial(slimmable_mlp_forward, out_w=out_w, tm=256))
    out32 = fwd32(x, slim32)
    jax.block_until_ready(out32)
    assert out32.shape == (batch, seq, int(out_size * width))
    assert jnp.allclose(out32, ref, atol=1e-5, rtol=1e-5), "f32 mismatch vs reference"

    # bf16 MXU path (fast default): bf16 operands, f32 accumulation, looser tolerance.
    slim16, out_w = prepare_slim_params(params, width, compute_dtype=jnp.bfloat16)
    fwd16 = jax.jit(functools.partial(slimmable_mlp_forward, out_w=out_w, tm=256))
    out16 = fwd16(x, slim16)
    jax.block_until_ready(out16)
    assert out16.shape == (batch, seq, int(out_size * width))
    assert jnp.allclose(out16, ref, atol=5e-2, rtol=5e-2), "bf16 mismatch vs reference"

    print("KERNEL_OK")
</pallas_src>

<mosaic_0001>
module attributes {stable_mosaic.version = 11 : i64} {
  func.func @_mlp_kernel(%arg0: i32, %arg1: memref<128x16xf32, #tpu.memory_space<vmem>>, %arg2: memref<16x128xf32, #tpu.memory_space<vmem>>, %arg3: memref<1x128xf32, #tpu.memory_space<vmem>>, %arg4: memref<128x128xf32, #tpu.memory_space<vmem>>, %arg5: memref<1x128xf32, #tpu.memory_space<vmem>>, %arg6: memref<128x128xf32, #tpu.memory_space<vmem>>) attributes {dimension_semantics = [#tpu.dimension_semantics<parallel>], iteration_bounds = array<i64: 1>, scalar_prefetch = 0 : i64, scratch_operands = 0 : i64, tpu.core_type = #tpu.core_type<tc>, window_params = [{transform_indices = @transform_0, window_bounds = array<i64: 128, 16>}, {pipeline_mode = #tpu.pipeline_mode<synchronous>, transform_indices = @transform_1, window_bounds = array<i64: 16, 128>}, {pipeline_mode = #tpu.pipeline_mode<synchronous>, transform_indices = @transform_2, window_bounds = array<i64: 1, 128>}, {pipeline_mode = #tpu.pipeline_mode<synchronous>, transform_indices = @transform_3, window_bounds = array<i64: 128, 128>}, {pipeline_mode = #tpu.pipeline_mode<synchronous>, transform_indices = @transform_4, window_bounds = array<i64: 1, 128>}, {transform_indices = @transform_5, window_bounds = array<i64: 128, 128>}]} {
    %c0 = arith.constant 0 : index
    %c0_0 = arith.constant 0 : index
    %0 = vector.load %arg1[%c0, %c0_0] : memref<128x16xf32, #tpu.memory_space<vmem>>, vector<128x16xf32>
    %c0_1 = arith.constant 0 : index
    %c0_2 = arith.constant 0 : index
    %1 = vector.load %arg2[%c0_1, %c0_2] : memref<16x128xf32, #tpu.memory_space<vmem>>, vector<16x128xf32>
    %cst = arith.constant dense<0.000000e+00> : vector<128x128xf32>
    %2 = tpu.matmul %0, %1, %cst {dimension_numbers = #tpu.dot_dimension_numbers<[1], [0], [0], [1], [0, 0, 1, 1], [], []>} : vector<128x16xf32>, vector<16x128xf32>, vector<128x128xf32> -> vector<128x128xf32>
    %c0_3 = arith.constant 0 : index
    %c0_4 = arith.constant 0 : index
    %3 = vector.load %arg3[%c0_3, %c0_4] : memref<1x128xf32, #tpu.memory_space<vmem>>, vector<1x128xf32>
    %4 = vector.broadcast %3 : vector<1x128xf32> to vector<128x128xf32>
    %5 = arith.addf %2, %4 : vector<128x128xf32>
    %cst_5 = arith.constant 0.000000e+00 : f32
    %6 = vector.broadcast %cst_5 : f32 to vector<128x128xf32>
    %7 = arith.maximumf %5, %6 : vector<128x128xf32>
    %c0_6 = arith.constant 0 : index
    %c0_7 = arith.constant 0 : index
    %8 = vector.load %arg4[%c0_6, %c0_7] : memref<128x128xf32, #tpu.memory_space<vmem>>, vector<128x128xf32>
    %cst_8 = arith.constant dense<0.000000e+00> : vector<128x128xf32>
    %9 = tpu.matmul %7, %8, %cst_8 {dimension_numbers = #tpu.dot_dimension_numbers<[1], [0], [0], [1], [0, 0, 1, 1], [], []>} : vector<128x128xf32>, vector<128x128xf32>, vector<128x128xf32> -> vector<128x128xf32>
    %c0_9 = arith.constant 0 : index
    %c0_10 = arith.constant 0 : index
    %10 = vector.load %arg5[%c0_9, %c0_10] : memref<1x128xf32, #tpu.memory_space<vmem>>, vector<1x128xf32>
    %11 = vector.broadcast %10 : vector<1x128xf32> to vector<128x128xf32>
    %12 = arith.addf %9, %11 : vector<128x128xf32>
    %c0_11 = arith.constant 0 : index
    %c0_12 = arith.constant 0 : index
    %13 = vector.load %arg6[%c0_11, %c0_12] : memref<128x128xf32, #tpu.memory_space<vmem>>, vector<128x128xf32>
    tpu.vector_store %arg6[%c0_11, %c0_12], %12 {strides = array<i32>} : memref<128x128xf32, #tpu.memory_space<vmem>>, vector<128x128xf32>,
    return
  }
  func.func @transform_0(%arg0: i32) -> (i32, i32) {
    %c0_i32 = arith.constant 0 : i32
    %c0_i32_0 = arith.constant 0 : i32
    return %arg0, %c0_i32 : i32, i32
  }
  func.func @transform_1(%arg0: i32) -> (i32, i32) {
    %c0_i32 = arith.constant 0 : i32
    %c0_i32_0 = arith.constant 0 : i32
    %c0_i32_1 = arith.constant 0 : i32
    return %c0_i32, %c0_i32_0 : i32, i32
  }
  func.func @transform_2(%arg0: i32) -> (i32, i32) {
    %c0_i32 = arith.constant 0 : i32
    %c0_i32_0 = arith.constant 0 : i32
    %c0_i32_1 = arith.constant 0 : i32
    return %c0_i32, %c0_i32_0 : i32, i32
  }
  func.func @transform_3(%arg0: i32) -> (i32, i32) {
    %c0_i32 = arith.constant 0 : i32
    %c0_i32_0 = arith.constant 0 : i32
    %c0_i32_1 = arith.constant 0 : i32
    return %c0_i32, %c0_i32_0 : i32, i32
  }
  func.func @transform_4(%arg0: i32) -> (i32, i32) {
    %c0_i32 = arith.constant 0 : i32
    %c0_i32_0 = arith.constant 0 : i32
    %c0_i32_1 = arith.constant 0 : i32
    return %c0_i32, %c0_i32_0 : i32, i32
  }
  func.func @transform_5(%arg0: i32) -> (i32, i32) {
    %c0_i32 = arith.constant 0 : i32
    %c0_i32_0 = arith.constant 0 : i32
    return %arg0, %c0_i32 : i32, i32
  }
}

</mosaic_0001>

<llo_original>
// kernel: slimmable_mlp_forward.1
$region0: #{slimmable_mlp_forward.1}
  #allocation0 [shape = 'u32[]', space=smem, size = 0x4, offset = 0x4, fixed_abs, tag = 'smem constant byte address 0x4 - core index']
  #allocation1 [shape = 'u32[144,128]{1,0:T(1,128)}', space=vmem, size = 0x12000, scoped, tag = 'internal scratch']
  %s0 = inlined_call_operand.vmem [shape: f32[128,16], index: 0, kind: input, shape index: {}]
  %s1 = inlined_call_operand.vmem [shape: f32[16,128], index: 1, kind: input, shape index: {}]
  %s2 = inlined_call_operand.vmem [shape: f32[1,128], index: 2, kind: input, shape index: {}]
  %s3 = inlined_call_operand.vmem [shape: f32[128,128], index: 3, kind: input, shape index: {}]
  %s4 = inlined_call_operand.vmem [shape: f32[1,128], index: 4, kind: input, shape index: {}]
  %s5 = inlined_call_operand.vmem [shape: f32[128,128], index: 5, kind: output, shape index: {}]
  %s6 = sld [smem:[#allocation0]]
  $region30: #{slimmable_mlp_forward.1} parent=0
    _
  %s8 = ssub.s32 1, %s6
  %s9 = scalar_select 0, %s8, %s6
  // Predicated region
  $region2: #{slimmable_mlp_forward.1} parent=0 // pred_check
    _
  $region3: #{slimmable_mlp_forward.1} parent=0 // pred_check_branch
    %11 = sbr.rel (0) target = $region5
  $region4: #{slimmable_mlp_forward.1} parent=0 // pred_region
    _
  $region5: #{slimmable_mlp_forward.1} parent=0 // pred_fallthru
    _
  // Predicated region
  $region6: #{slimmable_mlp_forward.1} parent=0 // pred_check
    _
  $region7: #{slimmable_mlp_forward.1} parent=0 // pred_check_branch
    %13 = sbr.rel (0) target = $region9
  $region8: #{slimmable_mlp_forward.1} parent=0 // pred_region
    _
  $region9: #{slimmable_mlp_forward.1} parent=0 // pred_fallthru
    _
  // Predicated region
  $region10: #{slimmable_mlp_forward.1} parent=0 // pred_check
    _
  $region11: #{slimmable_mlp_forward.1} parent=0 // pred_check_branch
    %15 = sbr.rel (0) target = $region13
  $region12: #{slimmable_mlp_forward.1} parent=0 // pred_region
    _
  $region13: #{slimmable_mlp_forward.1} parent=0 // pred_fallthru
    _
  // Predicated region
  $region14: #{slimmable_mlp_forward.1} parent=0 // pred_check
    _
  $region15: #{slimmable_mlp_forward.1} parent=0 // pred_check_branch
    %17 = sbr.rel (0) target = $region17
  $region16: #{slimmable_mlp_forward.1} parent=0 // pred_region
    _
  $region17: #{slimmable_mlp_forward.1} parent=0 // pred_fallthru
    _
  // Predicated region
  $region18: #{slimmable_mlp_forward.1} parent=0 // pred_check
    _
  $region19: #{slimmable_mlp_forward.1} parent=0 // pred_check_branch
    %19 = sbr.rel (0) target = $region21
  $region20: #{slimmable_mlp_forward.1} parent=0 // pred_region
    _
  $region21: #{slimmable_mlp_forward.1} parent=0 // pred_fallthru
    _
  %v20 = vld [vmem:[%s0] sm:$0xff]
  %v21 = vld [vmem:[%s0 + $0x8] sm:$0xff]
  %v22 = vld [vmem:[%s0 + $0x10] sm:$0xff]
  %v23 = vld [vmem:[%s0 + $0x18] sm:$0xff]
  %v24 = vld [vmem:[%s0 + $0x20] sm:$0xff]
  %v25 = vld [vmem:[%s0 + $0x28] sm:$0xff]
  %v26 = vld [vmem:[%s0 + $0x30] sm:$0xff]
  %v27 = vld [vmem:[%s0 + $0x38] sm:$0xff]
  %v28 = vld [vmem:[%s0 + $0x40] sm:$0xff]
  %v29 = vld [vmem:[%s0 + $0x48] sm:$0xff]
  %v30 = vld [vmem:[%s0 + $0x50] sm:$0xff]
  %v31 = vld [vmem:[%s0 + $0x58] sm:$0xff]
  %v32 = vld [vmem:[%s0 + $0x60] sm:$0xff]
  %v33 = vld [vmem:[%s0 + $0x68] sm:$0xff]
  %v34 = vld [vmem:[%s0 + $0x70] sm:$0xff]
  %v35 = vld [vmem:[%s0 + $0x78] sm:$0xff]
  %v36 = vld [vmem:[%s1] sm:$0xff]
  %v37 = vld [vmem:[%s1 + $0x8] sm:$0xff]
  %v38 = vld [vmem:[%s2] sm:$0x1]
  %v40 = vlaneseq
  %v41 = vshrl.u32 %v40, 7
  %v42 = vsub.s32 0, %v41
  %v43 = vrot.slane %v38, %v42
  %vm45 = vcmask 130048
  %v47 = vsel %vm45, %v20, 0
  %v50 = vsel %vm45, %v21, 0
  %v53 = vsel %vm45, %v22, 0
  %v56 = vsel %vm45, %v23, 0
  %v59 = vsel %vm45, %v24, 0
  %v62 = vsel %vm45, %v25, 0
  %v65 = vsel %vm45, %v26, 0
  %v68 = vsel %vm45, %v27, 0
  %v71 = vsel %vm45, %v28, 0
  %v74 = vsel %vm45, %v29, 0
  %v77 = vsel %vm45, %v30, 0
  %v80 = vsel %vm45, %v31, 0
  %v83 = vsel %vm45, %v32, 0
  %v86 = vsel %vm45, %v33, 0
  %v89 = vsel %vm45, %v34, 0
  %v92 = vsel %vm45, %v35, 0
  %94 = vmatprep.subr.mxu0 0.0
  %95 = vmatpush1.msra.mxu0 %v36
  %96 = vmatprep.subr.mxu0 0.0
  %97 = vmatpush1.msra.mxu0 %v37
  %98 = vmatprep.subr.mxu0 0.0
  %99 = vmatpush1.msra.mxu0 0.0
  %100 = vmatprep.subr.mxu0 0.0
  %101 = vmatpush1.msra.mxu0 0.0
  %102 = vmatprep.subr.mxu0 0.0
  %103 = vmatpush1.msra.mxu0 0.0
  %104 = vmatprep.subr.mxu0 0.0
  %105 = vmatpush1.msra.mxu0 0.0
  %106 = vmatprep.subr.mxu0 0.0
  %107 = vmatpush1.msra.mxu0 0.0
  %108 = vmatprep.subr.mxu0 0.0
  %109 = vmatpush1.msra.mxu0 0.0
  %110 = vmatprep.subr.mxu0 0.0
  %111 = vmatpush1.msra.mxu0 0.0
  %112 = vmatprep.subr.mxu0 0.0
  %113 = vmatpush1.msra.mxu0 0.0
  %114 = vmatprep.subr.mxu0 0.0
  %115 = vmatpush1.msra.mxu0 0.0
  %116 = vmatprep.subr.mxu0 0.0
  %117 = vmatpush1.msra.mxu0 0.0
  %118 = vmatprep.subr.mxu0 0.0
  %119 = vmatpush1.msra.mxu0 0.0
  %120 = vmatprep.subr.mxu0 0.0
  %121 = vmatpush1.msra.mxu0 0.0
  %122 = vmatprep.subr.mxu0 0.0
  %123 = vmatpush1.msra.mxu0 0.0
  %124 = vmatprep.subr.mxu0 0.0
  %125 = vmatpush1.msra.mxu0 0.0
  %126 = vmatprep.subr.mxu0 0.0
  %127 = vmatpush1.msra.mxu0 0.0
  %128 = vmatprep.subr.mxu0 0.0
  %129 = vmatpush1.msra.mxu0 0.0
  %130 = vmatprep.subr.mxu0 0.0
  %131 = vmatpush1.msra.mxu0 0.0
  %132 = vmatprep.subr.mxu0 0.0
  %133 = vmatpush1.msra.mxu0 0.0
  %134 = vmatprep.subr.mxu0 0.0
  %135 = vmatpush1.msra.mxu0 0.0
  %136 = vmatprep.subr.mxu0 0.0
  %137 = vmatpush1.msra.mxu0 0.0
  %138 = vmatprep.subr.mxu0 0.0
  %139 = vmatpush1.msra.mxu0 0.0
  %140 = vmatprep.subr.mxu0 0.0
  %141 = vmatpush1.msra.mxu0 0.0
  %142 = vmatprep.subr.mxu0 0.0
  %143 = vmatpush1.msra.mxu0 0.0
  %144 = vmatprep.subr.mxu0 0.0
  %145 = vmatpush1.msra.mxu0 0.0
  %146 = vmatprep.subr.mxu0 0.0
  %147 = vmatpush1.msra.mxu0 0.0
  %148 = vmatprep.subr.mxu0 0.0
  %149 = vmatpush1.msra.mxu0 0.0
  %150 = vmatprep.subr.mxu0 0.0
  %151 = vmatpush1.msra.mxu0 0.0
  %152 = vmatprep.subr.mxu0 0.0
  %153 = vmatpush1.msra.mxu0 0.0
  %154 = vmatprep.subr.mxu0 0.0
  %155 = vmatpush1.msra.mxu0 0.0
  %156 = vmatprep.subr.mxu0 0.0
  %157 = vmatpush1.msra.mxu0 0.0
  %158 = vmatprep.mubr.f32.mxu0 0.0
  %159 = vmatmul.mubr.f32.gmra.mrb[0].mxu0 %v47
  %v160 = vpop.f32.mrb[0].mxu0
  %v161 = vadd.f32 %v43, %v160
  %v162 = vpop.f32.mrb[0].mxu0
  %163 = vmatprep.mubr.f32.mxu0 0.0
  %164 = vmatmul.mubr.f32.gmra.mrb[0].mxu0 %v50
  %v165 = vpop.f32.mrb[0].mxu0
  %v166 = vadd.f32 %v43, %v165
  %v167 = vpop.f32.mrb[0].mxu0
  %168 = vmatprep.mubr.f32.mxu0 0.0
  %169 = vmatmul.mubr.f32.gmra.mrb[0].mxu0 %v53
  %v170 = vpop.f32.mrb[0].mxu0
  %v171 = vadd.f32 %v43, %v170
  %v172 = vpop.f32.mrb[0].mxu0
  %173 = vmatprep.mubr.f32.mxu0 0.0
  %174 = vmatmul.mubr.f32.gmra.mrb[0].mxu0 %v56
  %v175 = vpop.f32.mrb[0].mxu0
  %v176 = vadd.f32 %v43, %v175
  %v177 = vpop.f32.mrb[0].mxu0
  %178 = vmatprep.mubr.f32.mxu0 0.0
  %179 = vmatmul.mubr.f32.gmra.mrb[0].mxu0 %v59
  %v180 = vpop.f32.mrb[0].mxu0
  %v181 = vadd.f32 %v43, %v180
  %v182 = vpop.f32.mrb[0].mxu0
  %183 = vmatprep.mubr.f32.mxu0 0.0
  %184 = vmatmul.mubr.f32.gmra.mrb[0].mxu0 %v62
  %v185 = vpop.f32.mrb[0].mxu0
  %v186 = vadd.f32 %v43, %v185
  %v187 = vpop.f32.mrb[0].mxu0
  %188 = vmatprep.mubr.f32.mxu0 0.0
  %189 = vmatmul.mubr.f32.gmra.mrb[0].mxu0 %v65
  %v190 = vpop.f32.mrb[0].mxu0
  %v191 = vadd.f32 %v43, %v190
  %v192 = vpop.f32.mrb[0].mxu0
  %193 = vmatprep.mubr.f32.mxu0 0.0
  %194 = vmatmul.mubr.f32.gmra.mrb[0].mxu0 %v68
  %v195 = vpop.f32.mrb[0].mxu0
  %v196 = vadd.f32 %v43, %v195
  %v197 = vpop.f32.mrb[0].mxu0
  %198 = vmatprep.mubr.f32.mxu0 0.0
  %199 = vmatmul.mubr.f32.gmra.mrb[0].mxu0 %v71
  %v200 = vpop.f32.mrb[0].mxu0
  %v201 = vadd.f32 %v43, %v200
  %v202 = vpop.f32.mrb[0].mxu0
  %203 = vmatprep.mubr.f32.mxu0 0.0
  %204 = vmatmul.mubr.f32.gmra.mrb[0].mxu0 %v74
  %v205 = vpop.f32.mrb[0].mxu0
  %v206 = vadd.f32 %v43, %v205
  %v207 = vpop.f32.mrb[0].mxu0
  %208 = vmatprep.mubr.f32.mxu0 0.0
  %209 = vmatmul.mubr.f32.gmra.mrb[0].mxu0 %v77
  %v210 = vpop.f32.mrb[0].mxu0
  %v211 = vadd.f32 %v43, %v210
  %v212 = vpop.f32.mrb[0].mxu0
  %213 = vmatprep.mubr.f32.mxu0 0.0
  %214 = vmatmul.mubr.f32.gmra.mrb[0].mxu0 %v80
  %v215 = vpop.f32.mrb[0].mxu0
  %v216 = vadd.f32 %v43, %v215
  %v217 = vpop.f32.mrb[0].mxu0
  %218 = vmatprep.mubr.f32.mxu0 0.0
  %219 = vmatmul.mubr.f32.gmra.mrb[0].mxu0 %v83
  %v220 = vpop.f32.mrb[0].mxu0
  %v221 = vadd.f32 %v43, %v220
  %v222 = vpop.f32.mrb[0].mxu0
  %223 = vmatprep.mubr.f32.mxu0 0.0
  %224 = vmatmul.mubr.f32.gmra.mrb[0].mxu0 %v86
  %v225 = vpop.f32.mrb[0].mxu0
  %v226 = vadd.f32 %v43, %v225
  %v227 = vpop.f32.mrb[0].mxu0
  %228 = vmatprep.mubr.f32.mxu0 0.0
  %229 = vmatmul.mubr.f32.gmra.mrb[0].mxu0 %v89
  %v230 = vpop.f32.mrb[0].mxu0
  %v231 = vadd.f32 %v43, %v230
  %v232 = vpop.f32.mrb[0].mxu0
  %233 = vmatprep.mubr.f32.mxu0 0.0
  %234 = vmatmul.mubr.f32.gmra.mrb[0].mxu0 %v92
  %v235 = vpop.f32.mrb[0].mxu0
  %v236 = vadd.f32 %v43, %v235
  %v237 = vpop.f32.mrb[0].mxu0
  %238 = vdwg.mxu0
  %v239 = vmax.f32 %v161, 0.0
  %v240 = vmax.f32 %v166, 0.0
  %v241 = vmax.f32 %v171, 0.0
  %v242 = vmax.f32 %v176, 0.0
  %v243 = vmax.f32 %v181, 0.0
  %v244 = vmax.f32 %v186, 0.0
  %v245 = vmax.f32 %v191, 0.0
  %v246 = vmax.f32 %v196, 0.0
  %v247 = vmax.f32 %v201, 0.0
  %v248 = vmax.f32 %v206, 0.0
  %v249 = vmax.f32 %v211, 0.0
  %v250 = vmax.f32 %v216, 0.0
  %v251 = vmax.f32 %v221, 0.0
  %v252 = vmax.f32 %v226, 0.0
  %v253 = vmax.f32 %v231, 0.0
  %v254 = vmax.f32 %v236, 0.0
  %v255 = vld [vmem:[%s3] sm:$0xff]
  %v256 = vld [vmem:[%s3 + $0x8] sm:$0xff]
  %v257 = vld [vmem:[%s3 + $0x10] sm:$0xff]
  %v258 = vld [vmem:[%s3 + $0x18] sm:$0xff]
  %v259 = vld [vmem:[%s3 + $0x20] sm:$0xff]
  %v260 = vld [vmem:[%s3 + $0x28] sm:$0xff]
  %v261 = vld [vmem:[%s3 + $0x30] sm:$0xff]
  %v262 = vld [vmem:[%s3 + $0x38] sm:$0xff]
  %v263 = vld [vmem:[%s3 + $0x40] sm:$0xff]
  %v264 = vld [vmem:[%s3 + $0x48] sm:$0xff]
  %v265 = vld [vmem:[%s3 + $0x50] sm:$0xff]
  %v266 = vld [vmem:[%s3 + $0x58] sm:$0xff]
  %v267 = vld [vmem:[%s3 + $0x60] sm:$0xff]
  %v268 = vld [vmem:[%s3 + $0x68] sm:$0xff]
  %v269 = vld [vmem:[%s3 + $0x70] sm:$0xff]
  %v270 = vld [vmem:[%s3 + $0x78] sm:$0xff]
  %v271 = vld [vmem:[%s4] sm:$0x1]
  %v273 = vlaneseq
  %v274 = vshrl.u32 %v273, 7
  %v275 = vsub.s32 0, %v274
  %v276 = vrot.slane %v271, %v275
  %278 = vmatprep.subr.mxu0 0.0
  %279 = vmatpush1.msra.mxu0 %v255
  %280 = vmatprep.subr.mxu0 0.0
  %281 = vmatpush1.msra.mxu0 %v256
  %282 = vmatprep.subr.mxu0 0.0
  %283 = vmatpush1.msra.mxu0 %v257
  %284 = vmatprep.subr.mxu0 0.0
  %285 = vmatpush1.msra.mxu0 %v258
  %286 = vmatprep.subr.mxu0 0.0
  %287 = vmatpush1.msra.mxu0 %v259
  %288 = vmatprep.subr.mxu0 0.0
  %289 = vmatpush1.msra.mxu0 %v260
  %290 = vmatprep.subr.mxu0 0.0
  %291 = vmatpush1.msra.mxu0 %v261
  %292 = vmatprep.subr.mxu0 0.0
  %293 = vmatpush1.msra.mxu0 %v262
  %294 = vmatprep.subr.mxu0 0.0
  %295 = vmatpush1.msra.mxu0 %v263
  %296 = vmatprep.subr.mxu0 0.0
  %297 = vmatpush1.msra.mxu0 %v264
  %298 = vmatprep.subr.mxu0 0.0
  %299 = vmatpush1.msra.mxu0 %v265
  %300 = vmatprep.subr.mxu0 0.0
  %301 = vmatpush1.msra.mxu0 %v266
  %302 = vmatprep.subr.mxu0 0.0
  %303 = vmatpush1.msra.mxu0 %v267
  %304 = vmatprep.subr.mxu0 0.0
  %305 = vmatpush1.msra.mxu0 %v268
  %306 = vmatprep.subr.mxu0 0.0
  %307 = vmatpush1.msra.mxu0 %v269
  %308 = vmatprep.subr.mxu0 0.0
  %309 = vmatpush1.msra.mxu0 %v270
  %310 = vmatprep.subr.mxu0 0.0
  %311 = vmatpush1.msra.mxu0 0.0
  %312 = vmatprep.subr.mxu0 0.0
  %313 = vmatpush1.msra.mxu0 0.0
  %314 = vmatprep.subr.mxu0 0.0
  %315 = vmatpush1.msra.mxu0 0.0
  %316 = vmatprep.subr.mxu0 0.0
  %317 = vmatpush1.msra.mxu0 0.0
  %318 = vmatprep.subr.mxu0 0.0
  %319 = vmatpush1.msra.mxu0 0.0
  %320 = vmatprep.subr.mxu0 0.0
  %321 = vmatpush1.msra.mxu0 0.0
  %322 = vmatprep.subr.mxu0 0.0
  %323 = vmatpush1.msra.mxu0 0.0
  %324 = vmatprep.subr.mxu0 0.0
  %325 = vmatpush1.msra.mxu0 0.0
  %326 = vmatprep.subr.mxu0 0.0
  %327 = vmatpush1.msra.mxu0 0.0
  %328 = vmatprep.subr.mxu0 0.0
  %329 = vmatpush1.msra.mxu0 0.0
  %330 = vmatprep.subr.mxu0 0.0
  %331 = vmatpush1.msra.mxu0 0.0
  %332 = vmatprep.subr.mxu0 0.0
  %333 = vmatpush1.msra.mxu0 0.0
  %334 = vmatprep.subr.mxu0 0.0
  %335 = vmatpush1.msra.mxu0 0.0
  %336 = vmatprep.subr.mxu0 0.0
  %337 = vmatpush1.msra.mxu0 0.0
  %338 = vmatprep.subr.mxu0 0.0
  %339 = vmatpush1.msra.mxu0 0.0
  %340 = vmatprep.subr.mxu0 0.0
  %341 = vmatpush1.msra.mxu0 0.0
  %342 = vmatprep.mubr.f32.mxu0 0.0
  %343 = vmatmul.mubr.f32.gmra.mrb[0].mxu0 %v239
  %v344 = vpop.f32.mrb[0].mxu0
  %v345 = vadd.f32 %v276, %v344
  %v346 = vpop.f32.mrb[0].mxu0
  %347 = vmatprep.mubr.f32.mxu0 0.0
  %348 = vmatmul.mubr.f32.gmra.mrb[0].mxu0 %v240
  %v349 = vpop.f32.mrb[0].mxu0
  %v350 = vadd.f32 %v276, %v349
  %v351 = vpop.f32.mrb[0].mxu0
  %352 = vmatprep.mubr.f32.mxu0 0.0
  %353 = vmatmul.mubr.f32.gmra.mrb[0].mxu0 %v241
  %v354 = vpop.f32.mrb[0].mxu0
  %v355 = vadd.f32 %v276, %v354
  %v356 = vpop.f32.mrb[0].mxu0
  %357 = vmatprep.mubr.f32.mxu0 0.0
  %358 = vmatmul.mubr.f32.gmra.mrb[0].mxu0 %v242
  %v359 = vpop.f32.mrb[0].mxu0
  %v360 = vadd.f32 %v276, %v359
  %v361 = vpop.f32.mrb[0].mxu0
  %362 = vmatprep.mubr.f32.mxu0 0.0
  %363 = vmatmul.mubr.f32.gmra.mrb[0].mxu0 %v243
  %v364 = vpop.f32.mrb[0].mxu0
  %v365 = vadd.f32 %v276, %v364
  %v366 = vpop.f32.mrb[0].mxu0
  %367 = vmatprep.mubr.f32.mxu0 0.0
  %368 = vmatmul.mubr.f32.gmra.mrb[0].mxu0 %v244
  %v369 = vpop.f32.mrb[0].mxu0
  %v370 = vadd.f32 %v276, %v369
  %v371 = vpop.f32.mrb[0].mxu0
  %372 = vmatprep.mubr.f32.mxu0 0.0
  %373 = vmatmul.mubr.f32.gmra.mrb[0].mxu0 %v245
  %v374 = vpop.f32.mrb[0].mxu0
  %v375 = vadd.f32 %v276, %v374
  %v376 = vpop.f32.mrb[0].mxu0
  %377 = vmatprep.mubr.f32.mxu0 0.0
  %378 = vmatmul.mubr.f32.gmra.mrb[0].mxu0 %v246
  %v379 = vpop.f32.mrb[0].mxu0
  %v380 = vadd.f32 %v276, %v379
  %v381 = vpop.f32.mrb[0].mxu0
  %382 = vmatprep.mubr.f32.mxu0 0.0
  %383 = vmatmul.mubr.f32.gmra.mrb[0].mxu0 %v247
  %v384 = vpop.f32.mrb[0].mxu0
  %v385 = vadd.f32 %v276, %v384
  %v386 = vpop.f32.mrb[0].mxu0
  %387 = vmatprep.mubr.f32.mxu0 0.0
  %388 = vmatmul.mubr.f32.gmra.mrb[0].mxu0 %v248
  %v389 = vpop.f32.mrb[0].mxu0
  %v390 = vadd.f32 %v276, %v389
  %v391 = vpop.f32.mrb[0].mxu0
  %392 = vmatprep.mubr.f32.mxu0 0.0
  %393 = vmatmul.mubr.f32.gmra.mrb[0].mxu0 %v249
  %v394 = vpop.f32.mrb[0].mxu0
  %v395 = vadd.f32 %v276, %v394
  %v396 = vpop.f32.mrb[0].mxu0
  %397 = vmatprep.mubr.f32.mxu0 0.0
  %398 = vmatmul.mubr.f32.gmra.mrb[0].mxu0 %v250
  %v399 = vpop.f32.mrb[0].mxu0
  %v400 = vadd.f32 %v276, %v399
  %v401 = vpop.f32.mrb[0].mxu0
  %402 = vmatprep.mubr.f32.mxu0 0.0
  %403 = vmatmul.mubr.f32.gmra.mrb[0].mxu0 %v251
  %v404 = vpop.f32.mrb[0].mxu0
  %v405 = vadd.f32 %v276, %v404
  %v406 = vpop.f32.mrb[0].mxu0
  %407 = vmatprep.mubr.f32.mxu0 0.0
  %408 = vmatmul.mubr.f32.gmra.mrb[0].mxu0 %v252
  %v409 = vpop.f32.mrb[0].mxu0
  %v410 = vadd.f32 %v276, %v409
  %v411 = vpop.f32.mrb[0].mxu0
  %412 = vmatprep.mubr.f32.mxu0 0.0
  %413 = vmatmul.mubr.f32.gmra.mrb[0].mxu0 %v253
  %v414 = vpop.f32.mrb[0].mxu0
  %v415 = vadd.f32 %v276, %v414
  %v416 = vpop.f32.mrb[0].mxu0
  %417 = vmatprep.mubr.f32.mxu0 0.0
  %418 = vmatmul.mubr.f32.gmra.mrb[0].mxu0 %v254
  %v419 = vpop.f32.mrb[0].mxu0
  %v420 = vadd.f32 %v276, %v419
  %v421 = vpop.f32.mrb[0].mxu0
  %422 = vdwg.mxu0
  %423 = vst [vmem:[%s5] sm:$0xff] %v345
  %424 = vst [vmem:[%s5 + $0x8] sm:$0xff] %v350
  %425 = vst [vmem:[%s5 + $0x10] sm:$0xff] %v355
  %426 = vst [vmem:[%s5 + $0x18] sm:$0xff] %v360
  %427 = vst [vmem:[%s5 + $0x20] sm:$0xff] %v365
  %428 = vst [vmem:[%s5 + $0x28] sm:$0xff] %v370
  %429 = vst [vmem:[%s5 + $0x30] sm:$0xff] %v375
  %430 = vst [vmem:[%s5 + $0x38] sm:$0xff] %v380
  %431 = vst [vmem:[%s5 + $0x40] sm:$0xff] %v385
  %432 = vst [vmem:[%s5 + $0x48] sm:$0xff] %v390
  %433 = vst [vmem:[%s5 + $0x50] sm:$0xff] %v395
  %434 = vst [vmem:[%s5 + $0x58] sm:$0xff] %v400
  %435 = vst [vmem:[%s5 + $0x60] sm:$0xff] %v405
  %436 = vst [vmem:[%s5 + $0x68] sm:$0xff] %v410
  %437 = vst [vmem:[%s5 + $0x70] sm:$0xff] %v415
  %438 = vst [vmem:[%s5 + $0x78] sm:$0xff] %v420
  // Predicated region
  $region22: #{slimmable_mlp_forward.1} parent=0 // pred_check
    _
  $region23: #{slimmable_mlp_forward.1} parent=0 // pred_check_branch
    %440 = sbr.rel (0) target = $region25
  $region24: #{slimmable_mlp_forward.1} parent=0 // pred_region
    _
  $region25: #{slimmable_mlp_forward.1} parent=0 // pred_fallthru
    _
  // Predicated region
  $region26: #{slimmable_mlp_forward.1} parent=0 // pred_check
    _
  $region27: #{slimmable_mlp_forward.1} parent=0 // pred_check_branch
    %442 = sbr.rel (0) target = $region29
  $region28: #{slimmable_mlp_forward.1} parent=0 // pred_region
    _
  $region29: #{slimmable_mlp_forward.1} parent=0 // pred_fallthru
    _

</llo_original>
